<compile_context>
chip_gen: v7x
topology: tpu7x:2x2x1
jax: 0.10.0
libtpu: 0.0.40
codegen_flags: <defaults>
</compile_context>

<pallas_src>
import functools

import jax
import jax.numpy as jnp
from jax.experimental import pallas as pl
from jax.experimental.pallas import tpu as pltpu

HIDDEN_DIM = 64           # batch is forced to 64 by reshape(out, (hidden_dim, input_dim))
IMF_NUMS = 4
INPUT_DIM = IMF_NUMS + 1  # 5 channels (pred + 4 imfs)
RATE = 4
MID_DIM = int(INPUT_DIM / RATE)  # 1
REVIN_EPS = 1e-5
BN_EPS = 1e-5

# Packed parameter-table row indices (each row is INPUT_DIM = 5 wide).
_ROW_AFF_W = 0    # RevIN affine weight
_ROW_AFF_B = 1    # RevIN affine bias
_ROW_INV_AFF = 2  # 1 / (affine weight + eps^2), folded on the host
_ROW_L1_W = 3     # Linear(5->1) weight row
_ROW_L1_B = 4     # Linear(5->1) bias, replicated across the row
_ROW_L2_W = 5     # Linear(1->5) weight row
_ROW_L2_B = 6     # Linear(1->5) bias
_ROW_C1_W = 7     # Conv1d(5->1) center tap folded with eval-mode BN1 scale
_ROW_C1_B = 8     # Conv1d(5->1) bias folded with BN1, replicated across the row
_ROW_C2_W = 9     # Conv1d(1->5) center tap folded with BN2 scale
_ROW_C2_B = 10    # Conv1d(1->5) bias folded with BN2 scale/shift
_N_PARAM_ROWS = 11

# Lane layout of the single packed output slab (one unmasked (64, 128) store).
PACK_LANES = 128
_PACK_REC = 0
_PACK_W = HIDDEN_DIM                      # 64
_PACK_XN = _PACK_W + INPUT_DIM            # 69
_PACK_OUT = _PACK_XN + INPUT_DIM          # 74
_PACK_DATA = _PACK_OUT + INPUT_DIM        # 79
_PACK_USED = _PACK_DATA + INPUT_DIM       # 84
_PACK_PAD = PACK_LANES - _PACK_USED       # 44 zero lanes


def _sr_compute(data, p):
    """data: (HIDDEN_DIM, INPUT_DIM) f32; p: (_N_PARAM_ROWS, INPUT_DIM) f32.
    Returns the packed (HIDDEN_DIM, PACK_LANES) output slab."""
    aff_w = p[_ROW_AFF_W:_ROW_AFF_W + 1, :]       # (1, 5)
    aff_b = p[_ROW_AFF_B:_ROW_AFF_B + 1, :]
    inv_aff = p[_ROW_INV_AFF:_ROW_INV_AFF + 1, :]
    l1_w = p[_ROW_L1_W:_ROW_L1_W + 1, :]
    l1_b = p[_ROW_L1_B:_ROW_L1_B + 1, :]          # replicated scalar
    l2_w = p[_ROW_L2_W:_ROW_L2_W + 1, :]
    l2_b = p[_ROW_L2_B:_ROW_L2_B + 1, :]
    c1_w = p[_ROW_C1_W:_ROW_C1_W + 1, :]
    c1_b = p[_ROW_C1_B:_ROW_C1_B + 1, :]          # replicated scalar
    c2_w = p[_ROW_C2_W:_ROW_C2_W + 1, :]
    c2_b = p[_ROW_C2_B:_ROW_C2_B + 1, :]

    # ---- RevIN 'norm': two-pass scalar stats (robust; biased var >= 0 by construction) ----
    # TODO(synk): dim2reduce = range(1, ndim-1) = () is treated as a reduction over ALL
    # elements (same assumption as the previously accepted version); train-mode BN batch
    # statistics are not modeled (eval-mode fold only).
    inv_n = 1.0 / float(HIDDEN_DIM * INPUT_DIM)
    mean = jnp.sum(data) * inv_n
    centered = data - mean
    var = jnp.sum(centered * centered) * inv_n
    inv_std = jax.lax.rsqrt(var + REVIN_EPS)
    stdev = (var + REVIN_EPS) * inv_std                      # == sqrt(var + eps)
    x_norm = centered * inv_std * aff_w + aff_b              # (64, 5)

    # ---- channel attention: Linear(5->1) -> ReLU -> Linear(1->5), VPU only ----
    h = jnp.sum(x_norm * l1_w, axis=-1, keepdims=True)       # (64, 1)
    ch_att = jnp.maximum(h + l1_b, 0.0) * l2_w + l2_b        # (64, 5)
    x = x_norm * ch_att

    # ---- spatial attention: center-tap convs with folded eval-mode BN, VPU only ----
    s = jnp.sum(x * c1_w, axis=-1, keepdims=True)            # (64, 1)
    s = jnp.maximum(s + c1_b, 0.0) * c2_w + c2_b             # (64, 5)
    out = x * jax.nn.sigmoid(s)

    # ---- RevIN 'denorm' (affine reciprocal folded on the host) ----
    weights = (out - aff_b) * inv_aff * stdev + mean         # (64, 5)

    # ---- reconstruction on the MXU: rec[i, j] = sum_c data[i, c] * weights[j, c] ----
    # weights is needed in (64, 5) layout for the packed output below, so the single rhs
    # transpose in front of the MXU is unavoidable; keep the contraction on rhs dim 1 and
    # let Mosaic fold it (an explicit weights.T would be the same XLU pass, not a saving).
    rec = jax.lax.dot_general(
        data, weights,
        dimension_numbers=(((1,), (1,)), ((), ())),
        preferred_element_type=jnp.float32,
    )                                                        # (64, 64)

    # ---- one lane-dense slab -> one unmasked full-width store / one writeback DMA ----
    pad = jnp.zeros((HIDDEN_DIM, _PACK_PAD), jnp.float32)
    return jnp.concatenate([rec, weights, x_norm, out, data, pad], axis=-1)


def _sr_kernel_single(*refs):
    # refs = (pred_ref, imf_0 ... imf_{IMF_NUMS-1}, param_ref, packed_ref)
    col_refs = refs[:INPUT_DIM]
    p_ref = refs[INPUT_DIM]
    packed_ref = refs[INPUT_DIM + 1]

    # Assemble data = cat([pred] + imfs, dim=1) in-register (pure VPU lane selects),
    # so the wrapper needs no separate concatenate HLO / extra HBM round trip.
    lane = jax.lax.broadcasted_iota(jnp.int32, (HIDDEN_DIM, INPUT_DIM), 1)
    data = jnp.zeros((HIDDEN_DIM, INPUT_DIM), jnp.float32)
    for i, r in enumerate(col_refs):
        data = jnp.where(lane == i, r[...], data)

    packed_ref[...] = _sr_compute(data, p_ref[...])


def _sr_kernel_batched(data_ref, p_ref, packed_ref):
    packed_ref[0] = _sr_compute(data_ref[0], p_ref[...])


def _unpack(packed):
    rec = packed[..., _PACK_REC:_PACK_REC + HIDDEN_DIM]
    weights = packed[..., _PACK_W:_PACK_W + INPUT_DIM]
    x_norm = packed[..., _PACK_XN:_PACK_XN + INPUT_DIM]
    out = packed[..., _PACK_OUT:_PACK_OUT + INPUT_DIM]
    data = packed[..., _PACK_DATA:_PACK_DATA + INPUT_DIM]
    return rec, weights, data, x_norm, out


def signal_reconstructor_forward(pred, imfs, params):
    """Single-instance forward, mirrors SignalReconstructor.forward.
    Returns (reconstructed_signal, weights, data, x_norm, out)."""
    cols = [pred.astype(jnp.float32)] + [imf.astype(jnp.float32) for imf in imfs]
    packed = pl.pallas_call(
        _sr_kernel_single,
        out_shape=jax.ShapeDtypeStruct((HIDDEN_DIM, PACK_LANES), jnp.float32),
    )(*cols, params["table"])
    return _unpack(packed)


def signal_reconstructor_forward_batched(data_batched, params):
    """Batched forward over B independent (64, 5) instances behind one pallas_call.
    The leading grid axis is 'parallel' (sharded across v7x's two TensorCores).
    Returns (reconstructed_signal, weights, x_norm, out), each with a leading B dim."""
    b = data_batched.shape[0]
    packed = pl.pallas_call(
        _sr_kernel_batched,
        grid=(b,),
        in_specs=[
            pl.BlockSpec((1, HIDDEN_DIM, INPUT_DIM), lambda i: (i, 0, 0)),
            pl.BlockSpec((_N_PARAM_ROWS, INPUT_DIM), lambda i: (0, 0)),
        ],
        out_specs=pl.BlockSpec((1, HIDDEN_DIM, PACK_LANES), lambda i: (i, 0, 0)),
        out_shape=jax.ShapeDtypeStruct((b, HIDDEN_DIM, PACK_LANES), jnp.float32),
        compiler_params=pltpu.CompilerParams(dimension_semantics=("parallel",)),
    )(data_batched.astype(jnp.float32), params["table"])
    rec, weights, _, x_norm, out = _unpack(packed)
    return rec, weights, x_norm, out


def init_params(key):
    """Deterministic synthetic parameters (shapes follow the torch __init__), pre-folded
    and packed into a single (11, 5) kernel parameter table."""
    k1, k2, k3, k4 = jax.random.split(key, 4)

    # channel_attention: Linear(5 -> 1), Linear(1 -> 5)  (torch weight is (out, in))
    lin1_w_t = 0.3 * jax.random.normal(k1, (MID_DIM, INPUT_DIM), jnp.float32)
    lin1_b = 0.1 * jnp.ones((MID_DIM,), jnp.float32)
    lin2_w_t = 0.3 * jax.random.normal(k2, (INPUT_DIM, MID_DIM), jnp.float32)
    lin2_b = 0.05 * jnp.ones((INPUT_DIM,), jnp.float32)

    # spatial_attention: Conv1d(5->1, k=7, pad=3), Conv1d(1->5, k=7, pad=3)
    conv1_w = 0.3 * jax.random.normal(k3, (MID_DIM, INPUT_DIM, 7), jnp.float32)
    conv1_b = 0.02 * jnp.ones((MID_DIM,), jnp.float32)
    conv2_w = 0.3 * jax.random.normal(k4, (INPUT_DIM, MID_DIM, 7), jnp.float32)
    conv2_b = -0.02 * jnp.ones((INPUT_DIM,), jnp.float32)

    # BatchNorm1d at default init, inference mode (running_mean=0, running_var=1).
    def bn_fold(num_features):
        gamma = jnp.ones((num_features,), jnp.float32)
        beta = jnp.zeros((num_features,), jnp.float32)
        r_mean = jnp.zeros((num_features,), jnp.float32)
        r_var = jnp.ones((num_features,), jnp.float32)
        scale = gamma / jnp.sqrt(r_var + BN_EPS)
        shift = beta - r_mean * scale
        return scale, shift

    bn1_scale, bn1_shift = bn_fold(MID_DIM)      # (1,)
    bn2_scale, bn2_shift = bn_fold(INPUT_DIM)    # (5,)

    # RevIN affine at default init (+ host-folded reciprocal used by 'denorm').
    aff_w = jnp.ones((INPUT_DIM,), jnp.float32)
    aff_b = jnp.zeros((INPUT_DIM,), jnp.float32)
    inv_aff = 1.0 / (aff_w + REVIN_EPS * REVIN_EPS)

    # Fold + pack: spatial length is 1, so only the conv center tap (k=3) survives;
    # eval-mode BN is folded directly into those taps / biases.
    lin1_w_row = lin1_w_t[0, :]                                   # (5,)
    lin2_w_row = lin2_w_t[:, 0]                                   # (5,)
    conv1_w_row = conv1_w[0, :, 3] * bn1_scale[0]                 # (5,)  conv1 ∘ BN1
    conv1_b_fold = conv1_b[0] * bn1_scale[0] + bn1_shift[0]       # scalar
    conv2_w_row = conv2_w[:, 0, 3] * bn2_scale                    # (5,)  conv2 ∘ BN2
    conv2_b_fold = conv2_b * bn2_scale + bn2_shift                # (5,)

    table = jnp.stack(
        [
            aff_w,                                                # _ROW_AFF_W
            aff_b,                                                # _ROW_AFF_B
            inv_aff,                                              # _ROW_INV_AFF
            lin1_w_row,                                           # _ROW_L1_W
            jnp.full((INPUT_DIM,), lin1_b[0], jnp.float32),       # _ROW_L1_B (replicated)
            lin2_w_row,                                           # _ROW_L2_W
            lin2_b,                                               # _ROW_L2_B
            conv1_w_row,                                          # _ROW_C1_W
            jnp.full((INPUT_DIM,), conv1_b_fold, jnp.float32),    # _ROW_C1_B (replicated)
            conv2_w_row,                                          # _ROW_C2_W
            conv2_b_fold,                                         # _ROW_C2_B
        ],
        axis=0,
    ).astype(jnp.float32)
    assert table.shape == (_N_PARAM_ROWS, INPUT_DIM)
    return {"table": table}


if __name__ == "__main__":
    root = jax.random.PRNGKey(0)
    k_params, k_pred, k_imfs = jax.random.split(root, 3)

    # Batch must equal hidden_dim (=64): forward reshapes to (hidden_dim, input_dim).
    pred = jax.random.normal(k_pred, (HIDDEN_DIM, 1), jnp.float32)
    imf_keys = jax.random.split(k_imfs, IMF_NUMS)
    imfs = [jax.random.normal(k, (HIDDEN_DIM, 1), jnp.float32) for k in imf_keys]

    params = init_params(k_params)

    # --- single-instance (module-faithful) path: grid-less pallas_call ---
    fwd = jax.jit(functools.partial(signal_reconstructor_forward, params=params))
    rec, weights, data, x_norm, out = fwd(pred, imfs)
    jax.block_until_ready((rec, weights, data, x_norm, out))

    assert rec.shape == (HIDDEN_DIM, HIDDEN_DIM)
    assert weights.shape == (HIDDEN_DIM, INPUT_DIM)
    assert data.shape == (HIDDEN_DIM, INPUT_DIM)
    assert x_norm.shape == (HIDDEN_DIM, INPUT_DIM)
    assert out.shape == (HIDDEN_DIM, INPUT_DIM)

    # In-kernel data assembly must match cat([pred] + imfs, dim=1).
    data_host = jnp.concatenate([pred] + imfs, axis=1)
    assert bool(jnp.allclose(data, data_host, rtol=0.0, atol=0.0))

    # --- batched path: B copies of the same instance must reproduce the single result ---
    B = 4
    data_b = jnp.tile(data_host[None], (B, 1, 1))
    fwd_b = jax.jit(functools.partial(signal_reconstructor_forward_batched, params=params))
    rec_b, weights_b, x_norm_b, out_b = fwd_b(data_b)
    jax.block_until_ready((rec_b, weights_b, x_norm_b, out_b))

    assert rec_b.shape == (B, HIDDEN_DIM, HIDDEN_DIM)
    assert weights_b.shape == (B, HIDDEN_DIM, INPUT_DIM)
    assert bool(jnp.allclose(rec_b[0], rec, rtol=1e-5, atol=1e-5))
    assert bool(jnp.allclose(weights_b[-1], weights, rtol=1e-5, atol=1e-5))
    assert bool(jnp.allclose(x_norm_b[0], x_norm, rtol=1e-5, atol=1e-5))
    assert bool(jnp.allclose(out_b[0], out, rtol=1e-5, atol=1e-5))

    print("KERNEL_OK")
</pallas_src>

<mosaic_0001>
module attributes {stable_mosaic.version = 11 : i64} {
  func.func @_sr_kernel_single(%arg0: memref<64x1xf32, #tpu.memory_space<vmem>>, %arg1: memref<64x1xf32, #tpu.memory_space<vmem>>, %arg2: memref<64x1xf32, #tpu.memory_space<vmem>>, %arg3: memref<64x1xf32, #tpu.memory_space<vmem>>, %arg4: memref<64x1xf32, #tpu.memory_space<vmem>>, %arg5: memref<11x5xf32, #tpu.memory_space<vmem>>, %arg6: memref<64x128xf32, #tpu.memory_space<vmem>>) attributes {dimension_semantics = [], scalar_prefetch = 0 : i64, scratch_operands = 0 : i64, tpu.core_type = #tpu.core_type<tc>} {
    %0 = tpu.iota {dimensions = array<i32: 1>} : vector<64x5xi32>
    %cst = arith.constant 0.000000e+00 : f32
    %1 = vector.broadcast %cst : f32 to vector<64x5xf32>
    %c0_i32 = arith.constant 0 : i32
    %2 = vector.broadcast %c0_i32 : i32 to vector<64x5xi32>
    %3 = arith.cmpi eq, %0, %2 : vector<64x5xi32>
    %c0 = arith.constant 0 : index
    %c0_0 = arith.constant 0 : index
    %4 = vector.load %arg0[%c0, %c0_0] : memref<64x1xf32, #tpu.memory_space<vmem>>, vector<64x1xf32>
    %5 = vector.shape_cast %4 : vector<64x1xf32> to vector<64x1xf32>
    %6 = vector.broadcast %5 : vector<64x1xf32> to vector<64x5xf32>
    %7 = arith.select %3, %6, %1 : vector<64x5xi1>, vector<64x5xf32>
    %c1_i32 = arith.constant 1 : i32
    %8 = vector.broadcast %c1_i32 : i32 to vector<64x5xi32>
    %9 = arith.cmpi eq, %0, %8 : vector<64x5xi32>
    %c0_1 = arith.constant 0 : index
    %c0_2 = arith.constant 0 : index
    %10 = vector.load %arg1[%c0_1, %c0_2] : memref<64x1xf32, #tpu.memory_space<vmem>>, vector<64x1xf32>
    %11 = vector.shape_cast %10 : vector<64x1xf32> to vector<64x1xf32>
    %12 = vector.broadcast %11 : vector<64x1xf32> to vector<64x5xf32>
    %13 = arith.select %9, %12, %7 : vector<64x5xi1>, vector<64x5xf32>
    %c2_i32 = arith.constant 2 : i32
    %14 = vector.broadcast %c2_i32 : i32 to vector<64x5xi32>
    %15 = arith.cmpi eq, %0, %14 : vector<64x5xi32>
    %c0_3 = arith.constant 0 : index
    %c0_4 = arith.constant 0 : index
    %16 = vector.load %arg2[%c0_3, %c0_4] : memref<64x1xf32, #tpu.memory_space<vmem>>, vector<64x1xf32>
    %17 = vector.shape_cast %16 : vector<64x1xf32> to vector<64x1xf32>
    %18 = vector.broadcast %17 : vector<64x1xf32> to vector<64x5xf32>
    %19 = arith.select %15, %18, %13 : vector<64x5xi1>, vector<64x5xf32>
    %c3_i32 = arith.constant 3 : i32
    %20 = vector.broadcast %c3_i32 : i32 to vector<64x5xi32>
    %21 = arith.cmpi eq, %0, %20 : vector<64x5xi32>
    %c0_5 = arith.constant 0 : index
    %c0_6 = arith.constant 0 : index
    %22 = vector.load %arg3[%c0_5, %c0_6] : memref<64x1xf32, #tpu.memory_space<vmem>>, vector<64x1xf32>
    %23 = vector.shape_cast %22 : vector<64x1xf32> to vector<64x1xf32>
    %24 = vector.broadcast %23 : vector<64x1xf32> to vector<64x5xf32>
    %25 = arith.select %21, %24, %19 : vector<64x5xi1>, vector<64x5xf32>
    %c4_i32 = arith.constant 4 : i32
    %26 = vector.broadcast %c4_i32 : i32 to vector<64x5xi32>
    %27 = arith.cmpi eq, %0, %26 : vector<64x5xi32>
    %c0_7 = arith.constant 0 : index
    %c0_8 = arith.constant 0 : index
    %28 = vector.load %arg4[%c0_7, %c0_8] : memref<64x1xf32, #tpu.memory_space<vmem>>, vector<64x1xf32>
    %29 = vector.shape_cast %28 : vector<64x1xf32> to vector<64x1xf32>
    %30 = vector.broadcast %29 : vector<64x1xf32> to vector<64x5xf32>
    %31 = arith.select %27, %30, %25 : vector<64x5xi1>, vector<64x5xf32>
    %c0_9 = arith.constant 0 : index
    %c0_10 = arith.constant 0 : index
    %32 = vector.load %arg5[%c0_9, %c0_10] : memref<11x5xf32, #tpu.memory_space<vmem>>, vector<11x5xf32>
    %33 = vector.extract_strided_slice %32 {offsets = [0, 0], sizes = [1, 5], strides = [1, 1]} : vector<11x5xf32> to vector<1x5xf32>
    %34 = vector.extract_strided_slice %32 {offsets = [1, 0], sizes = [1, 5], strides = [1, 1]} : vector<11x5xf32> to vector<1x5xf32>
    %35 = vector.extract_strided_slice %32 {offsets = [2, 0], sizes = [1, 5], strides = [1, 1]} : vector<11x5xf32> to vector<1x5xf32>
    %36 = vector.extract_strided_slice %32 {offsets = [3, 0], sizes = [1, 5], strides = [1, 1]} : vector<11x5xf32> to vector<1x5xf32>
    %37 = vector.extract_strided_slice %32 {offsets = [4, 0], sizes = [1, 5], strides = [1, 1]} : vector<11x5xf32> to vector<1x5xf32>
    %38 = vector.extract_strided_slice %32 {offsets = [5, 0], sizes = [1, 5], strides = [1, 1]} : vector<11x5xf32> to vector<1x5xf32>
    %39 = vector.extract_strided_slice %32 {offsets = [6, 0], sizes = [1, 5], strides = [1, 1]} : vector<11x5xf32> to vector<1x5xf32>
    %40 = vector.extract_strided_slice %32 {offsets = [7, 0], sizes = [1, 5], strides = [1, 1]} : vector<11x5xf32> to vector<1x5xf32>
    %41 = vector.extract_strided_slice %32 {offsets = [8, 0], sizes = [1, 5], strides = [1, 1]} : vector<11x5xf32> to vector<1x5xf32>
    %42 = vector.extract_strided_slice %32 {offsets = [9, 0], sizes = [1, 5], strides = [1, 1]} : vector<11x5xf32> to vector<1x5xf32>
    %43 = vector.extract_strided_slice %32 {offsets = [10, 0], sizes = [1, 5], strides = [1, 1]} : vector<11x5xf32> to vector<1x5xf32>
    %44 = vector.shape_cast %31 : vector<64x5xf32> to vector<1x64x5xf32>
    %cst_11 = arith.constant dense<0.000000e+00> : vector<1xf32>
    %45 = vector.multi_reduction <add>, %44, %cst_11 [1, 2] : vector<1x64x5xf32> to vector<1xf32>
    %46 = vector.shape_cast %45 : vector<1xf32> to vector<1x1x1xf32>
    %47 = vector.extract %46[0, 0, 0] : f32 from vector<1x1x1xf32>
    %cst_12 = arith.constant 3.125000e-03 : f32
    %48 = arith.mulf %47, %cst_12 : f32
    %49 = vector.broadcast %48 : f32 to vector<64x5xf32>
    %50 = arith.subf %31, %49 : vector<64x5xf32>
    %51 = arith.mulf %50, %50 : vector<64x5xf32>
    %52 = vector.shape_cast %51 : vector<64x5xf32> to vector<1x64x5xf32>
    %cst_13 = arith.constant dense<0.000000e+00> : vector<1xf32>
    %53 = vector.multi_reduction <add>, %52, %cst_13 [1, 2] : vector<1x64x5xf32> to vector<1xf32>
    %54 = vector.shape_cast %53 : vector<1xf32> to vector<1x1x1xf32>
    %55 = vector.extract %54[0, 0, 0] : f32 from vector<1x1x1xf32>
    %cst_14 = arith.constant 3.125000e-03 : f32
    %56 = arith.mulf %55, %cst_14 : f32
    %cst_15 = arith.constant 9.99999974E-6 : f32
    %57 = arith.addf %56, %cst_15 : f32
    %58 = math.rsqrt %57 : f32
    %cst_16 = arith.constant 9.99999974E-6 : f32
    %59 = arith.addf %56, %cst_16 : f32
    %60 = arith.mulf %59, %58 : f32
    %61 = vector.broadcast %58 : f32 to vector<64x5xf32>
    %62 = arith.mulf %50, %61 : vector<64x5xf32>
    %63 = vector.broadcast %33 : vector<1x5xf32> to vector<64x5xf32>
    %64 = arith.mulf %62, %63 : vector<64x5xf32>
    %65 = vector.broadcast %34 : vector<1x5xf32> to vector<64x5xf32>
    %66 = arith.addf %64, %65 : vector<64x5xf32>
    %67 = vector.broadcast %36 : vector<1x5xf32> to vector<64x5xf32>
    %68 = arith.mulf %66, %67 : vector<64x5xf32>
    %cst_17 = arith.constant dense<0.000000e+00> : vector<64xf32>
    %69 = vector.multi_reduction <add>, %68, %cst_17 [1] : vector<64x5xf32> to vector<64xf32>
    %70 = vector.shape_cast %69 : vector<64xf32> to vector<64x1xf32>
    %71 = vector.broadcast %70 : vector<64x1xf32> to vector<64x5xf32>
    %72 = vector.broadcast %37 : vector<1x5xf32> to vector<64x5xf32>
    %73 = arith.addf %71, %72 : vector<64x5xf32>
    %cst_18 = arith.constant 0.000000e+00 : f32
    %74 = vector.broadcast %cst_18 : f32 to vector<64x5xf32>
    %75 = arith.maximumf %73, %74 : vector<64x5xf32>
    %76 = vector.broadcast %38 : vector<1x5xf32> to vector<64x5xf32>
    %77 = arith.mulf %75, %76 : vector<64x5xf32>
    %78 = vector.broadcast %39 : vector<1x5xf32> to vector<64x5xf32>
    %79 = arith.addf %77, %78 : vector<64x5xf32>
    %80 = arith.mulf %66, %79 : vector<64x5xf32>
    %81 = vector.broadcast %40 : vector<1x5xf32> to vector<64x5xf32>
    %82 = arith.mulf %80, %81 : vector<64x5xf32>
    %cst_19 = arith.constant dense<0.000000e+00> : vector<64xf32>
    %83 = vector.multi_reduction <add>, %82, %cst_19 [1] : vector<64x5xf32> to vector<64xf32>
    %84 = vector.shape_cast %83 : vector<64xf32> to vector<64x1xf32>
    %85 = vector.broadcast %84 : vector<64x1xf32> to vector<64x5xf32>
    %86 = vector.broadcast %41 : vector<1x5xf32> to vector<64x5xf32>
    %87 = arith.addf %85, %86 : vector<64x5xf32>
    %cst_20 = arith.constant 0.000000e+00 : f32
    %88 = vector.broadcast %cst_20 : f32 to vector<64x5xf32>
    %89 = arith.maximumf %87, %88 : vector<64x5xf32>
    %90 = vector.broadcast %42 : vector<1x5xf32> to vector<64x5xf32>
    %91 = arith.mulf %89, %90 : vector<64x5xf32>
    %92 = vector.broadcast %43 : vector<1x5xf32> to vector<64x5xf32>
    %93 = arith.addf %91, %92 : vector<64x5xf32>
    %94 = arith.negf %93 : vector<64x5xf32>
    %95 = math.exp %94 : vector<64x5xf32>
    %cst_21 = arith.constant 1.000000e+00 : f32
    %96 = vector.broadcast %cst_21 : f32 to vector<64x5xf32>
    %97 = arith.addf %96, %95 : vector<64x5xf32>
    %98 = arith.divf %96, %97 : vector<64x5xf32>
    %99 = arith.mulf %80, %98 : vector<64x5xf32>
    %100 = vector.broadcast %34 : vector<1x5xf32> to vector<64x5xf32>
    %101 = arith.subf %99, %100 : vector<64x5xf32>
    %102 = vector.broadcast %35 : vector<1x5xf32> to vector<64x5xf32>
    %103 = arith.mulf %101, %102 : vector<64x5xf32>
    %104 = vector.broadcast %60 : f32 to vector<64x5xf32>
    %105 = arith.mulf %103, %104 : vector<64x5xf32>
    %106 = vector.broadcast %48 : f32 to vector<64x5xf32>
    %107 = arith.addf %105, %106 : vector<64x5xf32>
    %cst_22 = arith.constant dense<0.000000e+00> : vector<64x64xf32>
    %108 = tpu.matmul %31, %107, %cst_22 {dimension_numbers = #tpu.dot_dimension_numbers<[1], [1], [0], [0], [0, 0, 1, 0], [], []>} : vector<64x5xf32>, vector<64x5xf32>, vector<64x64xf32> -> vector<64x64xf32>
    %cst_23 = arith.constant 0.000000e+00 : f32
    %109 = vector.broadcast %cst_23 : f32 to vector<64x44xf32>
    %110 = tpu.concatenate %108, %107, %66, %99, %31, %109 in 1 : vector<64x64xf32>, vector<64x5xf32>, vector<64x5xf32>, vector<64x5xf32>, vector<64x5xf32>, vector<64x44xf32> -> vector<64x128xf32>
    %c0_24 = arith.constant 0 : index
    %c0_25 = arith.constant 0 : index
    %111 = vector.load %arg6[%c0_24, %c0_25] : memref<64x128xf32, #tpu.memory_space<vmem>>, vector<64x128xf32>
    tpu.vector_store %arg6[%c0_24, %c0_25], %110 {strides = array<i32>} : memref<64x128xf32, #tpu.memory_space<vmem>>, vector<64x128xf32>,
    return
  }
}

</mosaic_0001>

<llo_original>
// kernel: signal_reconstructor_forward.1
$region0: #{signal_reconstructor_forward.1}
  #allocation0 [shape = 'u32[]', space=smem, size = 0x4, offset = 0x4, fixed_abs, tag = 'smem constant byte address 0x4 - core index']
  #allocation1 [shape = 'u32[144,128]{1,0:T(1,128)}', space=vmem, size = 0x12000, scoped, tag = 'internal scratch']
  %s0 = inlined_call_operand.vmem [shape: f32[64,1], index: 0, kind: input, shape index: {}]
  %s1 = inlined_call_operand.vmem [shape: f32[64,1], index: 1, kind: input, shape index: {}]
  %s2 = inlined_call_operand.vmem [shape: f32[64,1], index: 2, kind: input, shape index: {}]
  %s3 = inlined_call_operand.vmem [shape: f32[64,1], index: 3, kind: input, shape index: {}]
  %s4 = inlined_call_operand.vmem [shape: f32[64,1], index: 4, kind: input, shape index: {}]
  %s5 = inlined_call_operand.vmem [shape: f32[11,5], index: 5, kind: input, shape index: {}]
  %s6 = inlined_call_operand.vmem [shape: f32[64,128], index: 6, kind: output, shape index: {}]
  %s7 = sld [smem:[#allocation0]]
  $region34: #{signal_reconstructor_forward.1} parent=0
    _
  %s9 = ssub.s32 1, %s7
  %s10 = scalar_select 0, %s9, %s7
  // Predicated region
  $region2: #{signal_reconstructor_forward.1} parent=0 // pred_check
    _
  $region3: #{signal_reconstructor_forward.1} parent=0 // pred_check_branch
    %12 = sbr.rel (0) target = $region5
  $region4: #{signal_reconstructor_forward.1} parent=0 // pred_region
    _
  $region5: #{signal_reconstructor_forward.1} parent=0 // pred_fallthru
    _
  // Predicated region
  $region6: #{signal_reconstructor_forward.1} parent=0 // pred_check
    _
  $region7: #{signal_reconstructor_forward.1} parent=0 // pred_check_branch
    %14 = sbr.rel (0) target = $region9
  $region8: #{signal_reconstructor_forward.1} parent=0 // pred_region
    _
  $region9: #{signal_reconstructor_forward.1} parent=0 // pred_fallthru
    _
  // Predicated region
  $region10: #{signal_reconstructor_forward.1} parent=0 // pred_check
    _
  $region11: #{signal_reconstructor_forward.1} parent=0 // pred_check_branch
    %16 = sbr.rel (0) target = $region13
  $region12: #{signal_reconstructor_forward.1} parent=0 // pred_region
    _
  $region13: #{signal_reconstructor_forward.1} parent=0 // pred_fallthru
    _
  // Predicated region
  $region14: #{signal_reconstructor_forward.1} parent=0 // pred_check
    _
  $region15: #{signal_reconstructor_forward.1} parent=0 // pred_check_branch
    %18 = sbr.rel (0) target = $region17
  $region16: #{signal_reconstructor_forward.1} parent=0 // pred_region
    _
  $region17: #{signal_reconstructor_forward.1} parent=0 // pred_fallthru
    _
  // Predicated region
  $region18: #{signal_reconstructor_forward.1} parent=0 // pred_check
    _
  $region19: #{signal_reconstructor_forward.1} parent=0 // pred_check_branch
    %20 = sbr.rel (0) target = $region21
  $region20: #{signal_reconstructor_forward.1} parent=0 // pred_region
    _
  $region21: #{signal_reconstructor_forward.1} parent=0 // pred_fallthru
    _
  // Predicated region
  $region22: #{signal_reconstructor_forward.1} parent=0 // pred_check
    _
  $region23: #{signal_reconstructor_forward.1} parent=0 // pred_check_branch
    %22 = sbr.rel (0) target = $region25
  $region24: #{signal_reconstructor_forward.1} parent=0 // pred_region
    _
  $region25: #{signal_reconstructor_forward.1} parent=0 // pred_fallthru
    _
  %v23 = vlaneseq
  %v24 = vand.u32 %v23, 127
  %vm25 = vcmp.eq.s32.totalorder %v24, 0
  %v26 = vld [vmem:[%s0] sm:$0xff]
  %v27 = vld [vmem:[%s0 + $0x8] sm:$0xff]
  %v28 = vld [vmem:[%s0 + $0x10] sm:$0xff]
  %v29 = vld [vmem:[%s0 + $0x18] sm:$0xff]
  %v30 = vld [vmem:[%s0 + $0x20] sm:$0xff]
  %v31 = vld [vmem:[%s0 + $0x28] sm:$0xff]
  %v32 = vld [vmem:[%s0 + $0x30] sm:$0xff]
  %v33 = vld [vmem:[%s0 + $0x38] sm:$0xff]
  %35 = vset.pattern.permute.xlu0 0
  %36 = vperm.xlu0 %35, %v26
  %v37 = vpop.permute.xlu0 %36
  %40 = vset.pattern.permute.xlu0 0
  %41 = vperm.xlu0 %40, %v27
  %v42 = vpop.permute.xlu0 %41
  %45 = vset.pattern.permute.xlu0 0
  %46 = vperm.xlu0 %45, %v28
  %v47 = vpop.permute.xlu0 %46
  %50 = vset.pattern.permute.xlu0 0
  %51 = vperm.xlu0 %50, %v29
  %v52 = vpop.permute.xlu0 %51
  %55 = vset.pattern.permute.xlu0 0
  %56 = vperm.xlu0 %55, %v30
  %v57 = vpop.permute.xlu0 %56
  %60 = vset.pattern.permute.xlu0 0
  %61 = vperm.xlu0 %60, %v31
  %v62 = vpop.permute.xlu0 %61
  %65 = vset.pattern.permute.xlu0 0
  %66 = vperm.xlu0 %65, %v32
  %v67 = vpop.permute.xlu0 %66
  %70 = vset.pattern.permute.xlu0 0
  %71 = vperm.xlu0 %70, %v33
  %v72 = vpop.permute.xlu0 %71
  %v74 = vsel %vm25, %v37, 0.0
  %v75 = vsel %vm25, %v42, 0.0
  %v76 = vsel %vm25, %v47, 0.0
  %v77 = vsel %vm25, %v52, 0.0
  %v78 = vsel %vm25, %v57, 0.0
  %v79 = vsel %vm25, %v62, 0.0
  %v80 = vsel %vm25, %v67, 0.0
  %v81 = vsel %vm25, %v72, 0.0
  %vm82 = vcmp.eq.s32.totalorder %v24, 1
  %v83 = vld [vmem:[%s1] sm:$0xff]
  %v84 = vld [vmem:[%s1 + $0x8] sm:$0xff]
  %v85 = vld [vmem:[%s1 + $0x10] sm:$0xff]
  %v86 = vld [vmem:[%s1 + $0x18] sm:$0xff]
  %v87 = vld [vmem:[%s1 + $0x20] sm:$0xff]
  %v88 = vld [vmem:[%s1 + $0x28] sm:$0xff]
  %v89 = vld [vmem:[%s1 + $0x30] sm:$0xff]
  %v90 = vld [vmem:[%s1 + $0x38] sm:$0xff]
  %92 = vset.pattern.permute.xlu0 0
  %93 = vperm.xlu0 %92, %v83
  %v94 = vpop.permute.xlu0 %93
  %97 = vset.pattern.permute.xlu0 0
  %98 = vperm.xlu0 %97, %v84
  %v99 = vpop.permute.xlu0 %98
  %102 = vset.pattern.permute.xlu0 0
  %103 = vperm.xlu0 %102, %v85
  %v104 = vpop.permute.xlu0 %103
  %107 = vset.pattern.permute.xlu0 0
  %108 = vperm.xlu0 %107, %v86
  %v109 = vpop.permute.xlu0 %108
  %112 = vset.pattern.permute.xlu0 0
  %113 = vperm.xlu0 %112, %v87
  %v114 = vpop.permute.xlu0 %113
  %117 = vset.pattern.permute.xlu0 0
  %118 = vperm.xlu0 %117, %v88
  %v119 = vpop.permute.xlu0 %118
  %122 = vset.pattern.permute.xlu0 0
  %123 = vperm.xlu0 %122, %v89
  %v124 = vpop.permute.xlu0 %123
  %127 = vset.pattern.permute.xlu0 0
  %128 = vperm.xlu0 %127, %v90
  %v129 = vpop.permute.xlu0 %128
  %v131 = vsel %vm82, %v94, %v74
  %v132 = vsel %vm82, %v99, %v75
  %v133 = vsel %vm82, %v104, %v76
  %v134 = vsel %vm82, %v109, %v77
  %v135 = vsel %vm82, %v114, %v78
  %v136 = vsel %vm82, %v119, %v79
  %v137 = vsel %vm82, %v124, %v80
  %v138 = vsel %vm82, %v129, %v81
  %vm139 = vcmp.eq.s32.totalorder %v24, 2
  %v140 = vld [vmem:[%s2] sm:$0xff]
  %v141 = vld [vmem:[%s2 + $0x8] sm:$0xff]
  %v142 = vld [vmem:[%s2 + $0x10] sm:$0xff]
  %v143 = vld [vmem:[%s2 + $0x18] sm:$0xff]
  %v144 = vld [vmem:[%s2 + $0x20] sm:$0xff]
  %v145 = vld [vmem:[%s2 + $0x28] sm:$0xff]
  %v146 = vld [vmem:[%s2 + $0x30] sm:$0xff]
  %v147 = vld [vmem:[%s2 + $0x38] sm:$0xff]
  %149 = vset.pattern.permute.xlu0 0
  %150 = vperm.xlu0 %149, %v140
  %v151 = vpop.permute.xlu0 %150
  %154 = vset.pattern.permute.xlu0 0
  %155 = vperm.xlu0 %154, %v141
  %v156 = vpop.permute.xlu0 %155
  %159 = vset.pattern.permute.xlu0 0
  %160 = vperm.xlu0 %159, %v142
  %v161 = vpop.permute.xlu0 %160
  %164 = vset.pattern.permute.xlu0 0
  %165 = vperm.xlu0 %164, %v143
  %v166 = vpop.permute.xlu0 %165
  %169 = vset.pattern.permute.xlu0 0
  %170 = vperm.xlu0 %169, %v144
  %v171 = vpop.permute.xlu0 %170
  %174 = vset.pattern.permute.xlu0 0
  %175 = vperm.xlu0 %174, %v145
  %v176 = vpop.permute.xlu0 %175
  %179 = vset.pattern.permute.xlu0 0
  %180 = vperm.xlu0 %179, %v146
  %v181 = vpop.permute.xlu0 %180
  %184 = vset.pattern.permute.xlu0 0
  %185 = vperm.xlu0 %184, %v147
  %v186 = vpop.permute.xlu0 %185
  %v188 = vsel %vm139, %v151, %v131
  %v189 = vsel %vm139, %v156, %v132
  %v190 = vsel %vm139, %v161, %v133
  %v191 = vsel %vm139, %v166, %v134
  %v192 = vsel %vm139, %v171, %v135
  %v193 = vsel %vm139, %v176, %v136
  %v194 = vsel %vm139, %v181, %v137
  %v195 = vsel %vm139, %v186, %v138
  %vm196 = vcmp.eq.s32.totalorder %v24, 3
  %v197 = vld [vmem:[%s3] sm:$0xff]
  %v198 = vld [vmem:[%s3 + $0x8] sm:$0xff]
  %v199 = vld [vmem:[%s3 + $0x10] sm:$0xff]
  %v200 = vld [vmem:[%s3 + $0x18] sm:$0xff]
  %v201 = vld [vmem:[%s3 + $0x20] sm:$0xff]
  %v202 = vld [vmem:[%s3 + $0x28] sm:$0xff]
  %v203 = vld [vmem:[%s3 + $0x30] sm:$0xff]
  %v204 = vld [vmem:[%s3 + $0x38] sm:$0xff]
  %206 = vset.pattern.permute.xlu0 0
  %207 = vperm.xlu0 %206, %v197
  %v208 = vpop.permute.xlu0 %207
  %211 = vset.pattern.permute.xlu0 0
  %212 = vperm.xlu0 %211, %v198
  %v213 = vpop.permute.xlu0 %212
  %216 = vset.pattern.permute.xlu0 0
  %217 = vperm.xlu0 %216, %v199
  %v218 = vpop.permute.xlu0 %217
  %221 = vset.pattern.permute.xlu0 0
  %222 = vperm.xlu0 %221, %v200
  %v223 = vpop.permute.xlu0 %222
  %226 = vset.pattern.permute.xlu0 0
  %227 = vperm.xlu0 %226, %v201
  %v228 = vpop.permute.xlu0 %227
  %231 = vset.pattern.permute.xlu0 0
  %232 = vperm.xlu0 %231, %v202
  %v233 = vpop.permute.xlu0 %232
  %236 = vset.pattern.permute.xlu0 0
  %237 = vperm.xlu0 %236, %v203
  %v238 = vpop.permute.xlu0 %237
  %241 = vset.pattern.permute.xlu0 0
  %242 = vperm.xlu0 %241, %v204
  %v243 = vpop.permute.xlu0 %242
  %v245 = vsel %vm196, %v208, %v188
  %v246 = vsel %vm196, %v213, %v189
  %v247 = vsel %vm196, %v218, %v190
  %v248 = vsel %vm196, %v223, %v191
  %v249 = vsel %vm196, %v228, %v192
  %v250 = vsel %vm196, %v233, %v193
  %v251 = vsel %vm196, %v238, %v194
  %v252 = vsel %vm196, %v243, %v195
  %vm253 = vcmp.eq.s32.totalorder %v24, 4
  %v254 = vld [vmem:[%s4] sm:$0xff]
  %v255 = vld [vmem:[%s4 + $0x8] sm:$0xff]
  %v256 = vld [vmem:[%s4 + $0x10] sm:$0xff]
  %v257 = vld [vmem:[%s4 + $0x18] sm:$0xff]
  %v258 = vld [vmem:[%s4 + $0x20] sm:$0xff]
  %v259 = vld [vmem:[%s4 + $0x28] sm:$0xff]
  %v260 = vld [vmem:[%s4 + $0x30] sm:$0xff]
  %v261 = vld [vmem:[%s4 + $0x38] sm:$0xff]
  %263 = vset.pattern.permute.xlu0 0
  %264 = vperm.xlu0 %263, %v254
  %v265 = vpop.permute.xlu0 %264
  %268 = vset.pattern.permute.xlu0 0
  %269 = vperm.xlu0 %268, %v255
  %v270 = vpop.permute.xlu0 %269
  %273 = vset.pattern.permute.xlu0 0
  %274 = vperm.xlu0 %273, %v256
  %v275 = vpop.permute.xlu0 %274
  %278 = vset.pattern.permute.xlu0 0
  %279 = vperm.xlu0 %278, %v257
  %v280 = vpop.permute.xlu0 %279
  %283 = vset.pattern.permute.xlu0 0
  %284 = vperm.xlu0 %283, %v258
  %v285 = vpop.permute.xlu0 %284
  %288 = vset.pattern.permute.xlu0 0
  %289 = vperm.xlu0 %288, %v259
  %v290 = vpop.permute.xlu0 %289
  %293 = vset.pattern.permute.xlu0 0
  %294 = vperm.xlu0 %293, %v260
  %v295 = vpop.permute.xlu0 %294
  %298 = vset.pattern.permute.xlu0 0
  %299 = vperm.xlu0 %298, %v261
  %v300 = vpop.permute.xlu0 %299
  %v302 = vsel %vm253, %v265, %v245
  %v303 = vsel %vm253, %v270, %v246
  %v304 = vsel %vm253, %v275, %v247
  %v305 = vsel %vm253, %v280, %v248
  %v306 = vsel %vm253, %v285, %v249
  %v307 = vsel %vm253, %v290, %v250
  %v308 = vsel %vm253, %v295, %v251
  %v309 = vsel %vm253, %v300, %v252
  %v310 = vld [vmem:[%s5] sm:$0xff]
  %v311 = vld [vmem:[%s5 + $0x8] sm:$0x7]
  %vm312 = vcmask 39936
  %v313 = vsel %vm312, %v302, 0.0
  %v314 = vsel %vm312, %v303, 0.0
  %v315 = vadd.f32 %v313, %v314
  %v316 = vsel %vm312, %v304, 0.0
  %v317 = vadd.f32 %v315, %v316
  %v318 = vsel %vm312, %v305, 0.0
  %v319 = vadd.f32 %v317, %v318
  %v320 = vsel %vm312, %v306, 0.0
  %v321 = vadd.f32 %v319, %v320
  %v322 = vsel %vm312, %v307, 0.0
  %v323 = vadd.f32 %v321, %v322
  %v324 = vsel %vm312, %v308, 0.0
  %v325 = vadd.f32 %v323, %v324
  %v326 = vsel %vm312, %v309, 0.0
  %v327 = vadd.f32 %v325, %v326
  %328 = vadd.xlane.f32.xlu0 %v327
  %v329 = vpop.xlane.xlu0 %328
  %v330 = vrot.slane %v329, 4
  %v331 = vadd.f32 %v329, %v330
  %v332 = vrot.slane %v331, 2
  %v333 = vadd.f32 %v331, %v332
  %v334 = vrot.slane %v333, 1
  %v335 = vadd.f32 %v333, %v334
  %s336 = vtos %v335
  %s337 = smul.f32 %s336, 0.003125
  %v338 = vstv %s337
  %v339 = vsub.f32 %v302, %v338
  %v340 = vsub.f32 %v303, %v338
  %v341 = vsub.f32 %v304, %v338
  %v342 = vsub.f32 %v305, %v338
  %v343 = vsub.f32 %v306, %v338
  %v344 = vsub.f32 %v307, %v338
  %v345 = vsub.f32 %v308, %v338
  %v346 = vsub.f32 %v309, %v338
  %v347 = vmul.f32 %v339, %v339
  %v348 = vmul.f32 %v340, %v340
  %v349 = vmul.f32 %v341, %v341
  %v350 = vmul.f32 %v342, %v342
  %v351 = vmul.f32 %v343, %v343
  %v352 = vmul.f32 %v344, %v344
  %v353 = vmul.f32 %v345, %v345
  %v354 = vmul.f32 %v346, %v346
  %v355 = vsel %vm312, %v347, 0.0
  %v356 = vsel %vm312, %v348, 0.0
  %v357 = vadd.f32 %v355, %v356
  %v358 = vsel %vm312, %v349, 0.0
  %v359 = vadd.f32 %v357, %v358
  %v360 = vsel %vm312, %v350, 0.0
  %v361 = vadd.f32 %v359, %v360
  %v362 = vsel %vm312, %v351, 0.0
  %v363 = vadd.f32 %v361, %v362
  %v364 = vsel %vm312, %v352, 0.0
  %v365 = vadd.f32 %v363, %v364
  %v366 = vsel %vm312, %v353, 0.0
  %v367 = vadd.f32 %v365, %v366
  %v368 = vsel %vm312, %v354, 0.0
  %v369 = vadd.f32 %v367, %v368
  %370 = vadd.xlane.f32.xlu0 %v369
  %v371 = vpop.xlane.xlu0 %370
  %v372 = vrot.slane %v371, 4
  %v373 = vadd.f32 %v371, %v372
  %v374 = vrot.slane %v373, 2
  %v375 = vadd.f32 %v373, %v374
  %v376 = vrot.slane %v375, 1
  %v377 = vadd.f32 %v375, %v376
  %s378 = vtos %v377
  %s379 = smul.f32 %s378, 0.003125
  %s380 = sadd.f32 %s379, 1e-05
  %v381 = vstv %s380
  %v382 = vrsqrt.pop %v381
  %s383 = vtos %v382
  %s384 = smul.f32 %s380, %s383
  %v385 = vstv %s383
  %v386 = vmul.f32 %v339, %v385
  %v387 = vmul.f32 %v340, %v385
  %v388 = vmul.f32 %v341, %v385
  %v389 = vmul.f32 %v342, %v385
  %v390 = vmul.f32 %v343, %v385
  %v391 = vmul.f32 %v344, %v385
  %v392 = vmul.f32 %v345, %v385
  %v393 = vmul.f32 %v346, %v385
  %v394 = vlaneseq
  %v395 = vshrl.u32 %v394, 7
  %v396 = vsub.s32 0, %v395
  %v397 = vrot.slane %v310, %v396
  %v398 = vmul.f32 %v386, %v397
  %v399 = vmul.f32 %v387, %v397
  %v400 = vmul.f32 %v388, %v397
  %v401 = vmul.f32 %v389, %v397
  %v402 = vmul.f32 %v390, %v397
  %v403 = vmul.f32 %v391, %v397
  %v404 = vmul.f32 %v392, %v397
  %v405 = vmul.f32 %v393, %v397
  %v406 = vlaneseq
  %v407 = vshrl.u32 %v406, 7
  %v408 = vsub.s32 1, %v407
  %v409 = vrot.slane %v310, %v408
  %v410 = vadd.f32 %v398, %v409
  %v411 = vadd.f32 %v399, %v409
  %v412 = vadd.f32 %v400, %v409
  %v413 = vadd.f32 %v401, %v409
  %v414 = vadd.f32 %v402, %v409
  %v415 = vadd.f32 %v403, %v409
  %v416 = vadd.f32 %v404, %v409
  %v417 = vadd.f32 %v405, %v409
  %v418 = vlaneseq
  %v419 = vshrl.u32 %v418, 7
  %v420 = vsub.s32 3, %v419
  %v421 = vrot.slane %v310, %v420
  %v422 = vmul.f32 %v410, %v421
  %v423 = vmul.f32 %v411, %v421
  %v424 = vmul.f32 %v412, %v421
  %v425 = vmul.f32 %v413, %v421
  %v426 = vmul.f32 %v414, %v421
  %v427 = vmul.f32 %v415, %v421
  %v428 = vmul.f32 %v416, %v421
  %v429 = vmul.f32 %v417, %v421
  %v430 = vsel %vm312, %v422, 0.0
  %431 = vadd.xlane.f32.xlu0 %v430
  %v432 = vpop.xlane.xlu0 %431
  %v433 = vsel %vm312, %v423, 0.0
  %434 = vadd.xlane.f32.xlu0 %v433
  %v435 = vpop.xlane.xlu0 %434
  %v436 = vsel %vm312, %v424, 0.0
  %437 = vadd.xlane.f32.xlu0 %v436
  %v438 = vpop.xlane.xlu0 %437
  %v439 = vsel %vm312, %v425, 0.0
  %440 = vadd.xlane.f32.xlu0 %v439
  %v441 = vpop.xlane.xlu0 %440
  %v442 = vsel %vm312, %v426, 0.0
  %443 = vadd.xlane.f32.xlu0 %v442
  %v444 = vpop.xlane.xlu0 %443
  %v445 = vsel %vm312, %v427, 0.0
  %446 = vadd.xlane.f32.xlu0 %v445
  %v447 = vpop.xlane.xlu0 %446
  %v448 = vsel %vm312, %v428, 0.0
  %449 = vadd.xlane.f32.xlu0 %v448
  %v450 = vpop.xlane.xlu0 %449
  %v451 = vsel %vm312, %v429, 0.0
  %452 = vadd.xlane.f32.xlu0 %v451
  %v453 = vpop.xlane.xlu0 %452
  %v454 = vlaneseq
  %v455 = vshrl.u32 %v454, 7
  %v456 = vsub.s32 4, %v455
  %v457 = vrot.slane %v310, %v456
  %v458 = vadd.f32 %v432, %v457
  %v459 = vadd.f32 %v435, %v457
  %v460 = vadd.f32 %v438, %v457
  %v461 = vadd.f32 %v441, %v457
  %v462 = vadd.f32 %v444, %v457
  %v463 = vadd.f32 %v447, %v457
  %v464 = vadd.f32 %v450, %v457
  %v465 = vadd.f32 %v453, %v457
  %v466 = vmax.f32 %v458, 0.0
  %v467 = vmax.f32 %v459, 0.0
  %v468 = vmax.f32 %v460, 0.0
  %v469 = vmax.f32 %v461, 0.0
  %v470 = vmax.f32 %v462, 0.0
  %v471 = vmax.f32 %v463, 0.0
  %v472 = vmax.f32 %v464, 0.0
  %v473 = vmax.f32 %v465, 0.0
  %v474 = vlaneseq
  %v475 = vshrl.u32 %v474, 7
  %v476 = vsub.s32 5, %v475
  %v477 = vrot.slane %v310, %v476
  %v478 = vmul.f32 %v466, %v477
  %v479 = vmul.f32 %v467, %v477
  %v480 = vmul.f32 %v468, %v477
  %v481 = vmul.f32 %v469, %v477
  %v482 = vmul.f32 %v470, %v477
  %v483 = vmul.f32 %v471, %v477
  %v484 = vmul.f32 %v472, %v477
  %v485 = vmul.f32 %v473, %v477
  %v486 = vlaneseq
  %v487 = vshrl.u32 %v486, 7
  %v488 = vsub.s32 6, %v487
  %v489 = vrot.slane %v310, %v488
  %v490 = vadd.f32 %v478, %v489
  %v491 = vadd.f32 %v479, %v489
  %v492 = vadd.f32 %v480, %v489
  %v493 = vadd.f32 %v481, %v489
  %v494 = vadd.f32 %v482, %v489
  %v495 = vadd.f32 %v483, %v489
  %v496 = vadd.f32 %v484, %v489
  %v497 = vadd.f32 %v485, %v489
  %v498 = vmul.f32 %v410, %v490
  %v499 = vmul.f32 %v411, %v491
  %v500 = vmul.f32 %v412, %v492
  %v501 = vmul.f32 %v413, %v493
  %v502 = vmul.f32 %v414, %v494
  %v503 = vmul.f32 %v415, %v495
  %v504 = vmul.f32 %v416, %v496
  %v505 = vmul.f32 %v417, %v497
  %v506 = vlaneseq
  %v507 = vshrl.u32 %v506, 7
  %v508 = vsub.s32 7, %v507
  %v509 = vrot.slane %v310, %v508
  %v510 = vmul.f32 %v498, %v509
  %v511 = vmul.f32 %v499, %v509
  %v512 = vmul.f32 %v500, %v509
  %v513 = vmul.f32 %v501, %v509
  %v514 = vmul.f32 %v502, %v509
  %v515 = vmul.f32 %v503, %v509
  %v516 = vmul.f32 %v504, %v509
  %v517 = vmul.f32 %v505, %v509
  %v518 = vsel %vm312, %v510, 0.0
  %519 = vadd.xlane.f32.xlu0 %v518
  %v520 = vpop.xlane.xlu0 %519
  %v521 = vsel %vm312, %v511, 0.0
  %522 = vadd.xlane.f32.xlu0 %v521
  %v523 = vpop.xlane.xlu0 %522
  %v524 = vsel %vm312, %v512, 0.0
  %525 = vadd.xlane.f32.xlu0 %v524
  %v526 = vpop.xlane.xlu0 %525
  %v527 = vsel %vm312, %v513, 0.0
  %528 = vadd.xlane.f32.xlu0 %v527
  %v529 = vpop.xlane.xlu0 %528
  %v530 = vsel %vm312, %v514, 0.0
  %531 = vadd.xlane.f32.xlu0 %v530
  %v532 = vpop.xlane.xlu0 %531
  %v533 = vsel %vm312, %v515, 0.0
  %534 = vadd.xlane.f32.xlu0 %v533
  %v535 = vpop.xlane.xlu0 %534
  %v536 = vsel %vm312, %v516, 0.0
  %537 = vadd.xlane.f32.xlu0 %v536
  %v538 = vpop.xlane.xlu0 %537
  %v539 = vsel %vm312, %v517, 0.0
  %540 = vadd.xlane.f32.xlu0 %v539
  %v541 = vpop.xlane.xlu0 %540
  %v542 = vlaneseq
  %v543 = vshrl.u32 %v542, 7
  %v544 = vsub.s32 0, %v543
  %v545 = vrot.slane %v311, %v544
  %v546 = vadd.f32 %v520, %v545
  %v547 = vadd.f32 %v523, %v545
  %v548 = vadd.f32 %v526, %v545
  %v549 = vadd.f32 %v529, %v545
  %v550 = vadd.f32 %v532, %v545
  %v551 = vadd.f32 %v535, %v545
  %v552 = vadd.f32 %v538, %v545
  %v553 = vadd.f32 %v541, %v545
  %v554 = vmax.f32 %v546, 0.0
  %v555 = vmax.f32 %v547, 0.0
  %v556 = vmax.f32 %v548, 0.0
  %v557 = vmax.f32 %v549, 0.0
  %v558 = vmax.f32 %v550, 0.0
  %v559 = vmax.f32 %v551, 0.0
  %v560 = vmax.f32 %v552, 0.0
  %v561 = vmax.f32 %v553, 0.0
  %v562 = vlaneseq
  %v563 = vshrl.u32 %v562, 7
  %v564 = vsub.s32 1, %v563
  %v565 = vrot.slane %v311, %v564
  %v566 = vmul.f32 %v554, %v565
  %v567 = vmul.f32 %v555, %v565
  %v568 = vmul.f32 %v556, %v565
  %v569 = vmul.f32 %v557, %v565
  %v570 = vmul.f32 %v558, %v565
  %v571 = vmul.f32 %v559, %v565
  %v572 = vmul.f32 %v560, %v565
  %v573 = vmul.f32 %v561, %v565
  %v574 = vlaneseq
  %v575 = vshrl.u32 %v574, 7
  %v576 = vsub.s32 2, %v575
  %v577 = vrot.slane %v311, %v576
  %v578 = vadd.f32 %v566, %v577
  %v579 = vadd.f32 %v567, %v577
  %v580 = vadd.f32 %v568, %v577
  %v581 = vadd.f32 %v569, %v577
  %v582 = vadd.f32 %v570, %v577
  %v583 = vadd.f32 %v571, %v577
  %v584 = vadd.f32 %v572, %v577
  %v585 = vadd.f32 %v573, %v577
  %v586 = vxor.u32 %v578, 2147483648
  %v587 = vxor.u32 %v579, 2147483648
  %v588 = vxor.u32 %v580, 2147483648
  %v589 = vxor.u32 %v581, 2147483648
  %v590 = vxor.u32 %v582, 2147483648
  %v591 = vxor.u32 %v583, 2147483648
  %v592 = vxor.u32 %v584, 2147483648
  %v593 = vxor.u32 %v585, 2147483648
  %v594 = vmul.f32 %v586, 1.442695
  %v595 = vpow.pop %v594
  %v596 = vmul.f32 %v587, 1.442695
  %v597 = vpow.pop %v596
  %v598 = vmul.f32 %v588, 1.442695
  %v599 = vpow.pop %v598
  %v600 = vmul.f32 %v589, 1.442695
  %v601 = vpow.pop %v600
  %v602 = vmul.f32 %v590, 1.442695
  %v603 = vpow.pop %v602
  %v604 = vmul.f32 %v591, 1.442695
  %v605 = vpow.pop %v604
  %v606 = vmul.f32 %v592, 1.442695
  %v607 = vpow.pop %v606
  %v608 = vmul.f32 %v593, 1.442695
  %v609 = vpow.pop %v608
  %v610 = vadd.f32 %v595, 1.0
  %v611 = vadd.f32 %v597, 1.0
  %v612 = vadd.f32 %v599, 1.0
  %v613 = vadd.f32 %v601, 1.0
  %v614 = vadd.f32 %v603, 1.0
  %v615 = vadd.f32 %v605, 1.0
  %v616 = vadd.f32 %v607, 1.0
  %v617 = vadd.f32 %v609, 1.0
  %v618 = vrcp.pop %v610
  %v619 = vmul.f32 1.0, %v618
  %v620 = vrcp.pop %v611
  %v621 = vmul.f32 1.0, %v620
  %v622 = vrcp.pop %v612
  %v623 = vmul.f32 1.0, %v622
  %v624 = vrcp.pop %v613
  %v625 = vmul.f32 1.0, %v624
  %v626 = vrcp.pop %v614
  %v627 = vmul.f32 1.0, %v626
  %v628 = vrcp.pop %v615
  %v629 = vmul.f32 1.0, %v628
  %v630 = vrcp.pop %v616
  %v631 = vmul.f32 1.0, %v630
  %v632 = vrcp.pop %v617
  %v633 = vmul.f32 1.0, %v632
  %v634 = vmul.f32 %v498, %v619
  %v635 = vmul.f32 %v499, %v621
  %v636 = vmul.f32 %v500, %v623
  %v637 = vmul.f32 %v501, %v625
  %v638 = vmul.f32 %v502, %v627
  %v639 = vmul.f32 %v503, %v629
  %v640 = vmul.f32 %v504, %v631
  %v641 = vmul.f32 %v505, %v633
  %v642 = vsub.f32 %v634, %v409
  %v643 = vsub.f32 %v635, %v409
  %v644 = vsub.f32 %v636, %v409
  %v645 = vsub.f32 %v637, %v409
  %v646 = vsub.f32 %v638, %v409
  %v647 = vsub.f32 %v639, %v409
  %v648 = vsub.f32 %v640, %v409
  %v649 = vsub.f32 %v641, %v409
  %v650 = vlaneseq
  %v651 = vshrl.u32 %v650, 7
  %v652 = vsub.s32 2, %v651
  %v653 = vrot.slane %v310, %v652
  %v654 = vmul.f32 %v642, %v653
  %v655 = vmul.f32 %v643, %v653
  %v656 = vmul.f32 %v644, %v653
  %v657 = vmul.f32 %v645, %v653
  %v658 = vmul.f32 %v646, %v653
  %v659 = vmul.f32 %v647, %v653
  %v660 = vmul.f32 %v648, %v653
  %v661 = vmul.f32 %v649, %v653
  %v662 = vstv %s384
  %v663 = vmul.f32 %v654, %v662
  %v664 = vmul.f32 %v655, %v662
  %v665 = vmul.f32 %v656, %v662
  %v666 = vmul.f32 %v657, %v662
  %v667 = vmul.f32 %v658, %v662
  %v668 = vmul.f32 %v659, %v662
  %v669 = vmul.f32 %v660, %v662
  %v670 = vmul.f32 %v661, %v662
  %v671 = vadd.f32 %v663, %v338
  %v672 = vadd.f32 %v664, %v338
  %v673 = vadd.f32 %v665, %v338
  %v674 = vadd.f32 %v666, %v338
  %v675 = vadd.f32 %v667, %v338
  %v676 = vadd.f32 %v668, %v338
  %v677 = vadd.f32 %v669, %v338
  %v678 = vadd.f32 %v670, %v338
  %v680 = vsel %vm312, %v302, 0
  %v683 = vsel %vm312, %v303, 0
  %v686 = vsel %vm312, %v304, 0
  %v689 = vsel %vm312, %v305, 0
  %v692 = vsel %vm312, %v306, 0
  %v695 = vsel %vm312, %v307, 0
  %v698 = vsel %vm312, %v308, 0
  %v701 = vsel %vm312, %v309, 0
  %v704 = vsel %vm312, %v671, 0
  %v707 = vsel %vm312, %v672, 0
  %v710 = vsel %vm312, %v673, 0
  %v713 = vsel %vm312, %v674, 0
  %v716 = vsel %vm312, %v675, 0
  %v719 = vsel %vm312, %v676, 0
  %v722 = vsel %vm312, %v677, 0
  %v725 = vsel %vm312, %v678, 0
  %727 = vmatprep.subr.mxu0 0.0
  %728 = vmatpush1.xpose.msra.mxu0 %v704
  %729 = vmatprep.subr.mxu0 0.0
  %730 = vmatpush1.xpose.msra.mxu0 %v707
  %731 = vmatprep.subr.mxu0 0.0
  %732 = vmatpush1.xpose.msra.mxu0 %v710
  %733 = vmatprep.subr.mxu0 0.0
  %734 = vmatpush1.xpose.msra.mxu0 %v713
  %735 = vmatprep.subr.mxu0 0.0
  %736 = vmatpush1.xpose.msra.mxu0 %v716
  %737 = vmatprep.subr.mxu0 0.0
  %738 = vmatpush1.xpose.msra.mxu0 %v719
  %739 = vmatprep.subr.mxu0 0.0
  %740 = vmatpush1.xpose.msra.mxu0 %v722
  %741 = vmatprep.subr.mxu0 0.0
  %742 = vmatpush1.xpose.msra.mxu0 %v725
  %743 = vmatprep.subr.mxu0 0.0
  %744 = vmatpush1.xpose.msra.mxu0 0.0
  %745 = vmatprep.subr.mxu0 0.0
  %746 = vmatpush1.xpose.msra.mxu0 0.0
  %747 = vmatprep.subr.mxu0 0.0
  %748 = vmatpush1.xpose.msra.mxu0 0.0
  %749 = vmatprep.subr.mxu0 0.0
  %750 = vmatpush1.xpose.msra.mxu0 0.0
  %751 = vmatprep.subr.mxu0 0.0
  %752 = vmatpush1.xpose.msra.mxu0 0.0
  %753 = vmatprep.subr.mxu0 0.0
  %754 = vmatpush1.xpose.msra.mxu0 0.0
  %755 = vmatprep.subr.mxu0 0.0
  %756 = vmatpush1.xpose.msra.mxu0 0.0
  %757 = vmatprep.subr.mxu0 0.0
  %758 = vmatpush1.xpose.msra.mxu0 0.0
  %759 = vmatprep.subr.mxu0 0.0
  %760 = vmatpush1.xpose.msra.mxu0 0.0
  %761 = vmatprep.subr.mxu0 0.0
  %762 = vmatpush1.xpose.msra.mxu0 0.0
  %763 = vmatprep.subr.mxu0 0.0
  %764 = vmatpush1.xpose.msra.mxu0 0.0
  %765 = vmatprep.subr.mxu0 0.0
  %766 = vmatpush1.xpose.msra.mxu0 0.0
  %767 = vmatprep.subr.mxu0 0.0
  %768 = vmatpush1.xpose.msra.mxu0 0.0
  %769 = vmatprep.subr.mxu0 0.0
  %770 = vmatpush1.xpose.msra.mxu0 0.0
  %771 = vmatprep.subr.mxu0 0.0
  %772 = vmatpush1.xpose.msra.mxu0 0.0
  %773 = vmatprep.subr.mxu0 0.0
  %774 = vmatpush1.xpose.msra.mxu0 0.0
  %775 = vmatprep.subr.mxu0 0.0
  %776 = vmatpush1.xpose.msra.mxu0 0.0
  %777 = vmatprep.subr.mxu0 0.0
  %778 = vmatpush1.xpose.msra.mxu0 0.0
  %779 = vmatprep.subr.mxu0 0.0
  %780 = vmatpush1.xpose.msra.mxu0 0.0
  %781 = vmatprep.subr.mxu0 0.0
  %782 = vmatpush1.xpose.msra.mxu0 0.0
  %783 = vmatprep.subr.mxu0 0.0
  %784 = vmatpush1.xpose.msra.mxu0 0.0
  %785 = vmatprep.subr.mxu0 0.0
  %786 = vmatpush1.xpose.msra.mxu0 0.0
  %787 = vmatprep.subr.mxu0 0.0
  %788 = vmatpush1.xpose.msra.mxu0 0.0
  %789 = vmatprep.subr.mxu0 0.0
  %790 = vmatpush1.xpose.msra.mxu0 0.0
  %791 = vmatprep.mubr.f32.mxu0 0.0
  %792 = vmatmul.mubr.f32.gmra.mrb[0].mxu0 %v680
  %v793 = vpop.f32.mrb[0].mxu0
  %v794 = vadd.f32 0.0, %v793
  %v795 = vpop.f32.mrb[0].mxu0
  %796 = vmatprep.mubr.f32.mxu0 0.0
  %797 = vmatmul.mubr.f32.gmra.mrb[0].mxu0 %v683
  %v798 = vpop.f32.mrb[0].mxu0
  %v799 = vadd.f32 0.0, %v798
  %v800 = vpop.f32.mrb[0].mxu0
  %801 = vmatprep.mubr.f32.mxu0 0.0
  %802 = vmatmul.mubr.f32.gmra.mrb[0].mxu0 %v686
  %v803 = vpop.f32.mrb[0].mxu0
  %v804 = vadd.f32 0.0, %v803
  %v805 = vpop.f32.mrb[0].mxu0
  %806 = vmatprep.mubr.f32.mxu0 0.0
  %807 = vmatmul.mubr.f32.gmra.mrb[0].mxu0 %v689
  %v808 = vpop.f32.mrb[0].mxu0
  %v809 = vadd.f32 0.0, %v808
  %v810 = vpop.f32.mrb[0].mxu0
  %811 = vmatprep.mubr.f32.mxu0 0.0
  %812 = vmatmul.mubr.f32.gmra.mrb[0].mxu0 %v692
  %v813 = vpop.f32.mrb[0].mxu0
  %v814 = vadd.f32 0.0, %v813
  %v815 = vpop.f32.mrb[0].mxu0
  %816 = vmatprep.mubr.f32.mxu0 0.0
  %817 = vmatmul.mubr.f32.gmra.mrb[0].mxu0 %v695
  %v818 = vpop.f32.mrb[0].mxu0
  %v819 = vadd.f32 0.0, %v818
  %v820 = vpop.f32.mrb[0].mxu0
  %821 = vmatprep.mubr.f32.mxu0 0.0
  %822 = vmatmul.mubr.f32.gmra.mrb[0].mxu0 %v698
  %v823 = vpop.f32.mrb[0].mxu0
  %v824 = vadd.f32 0.0, %v823
  %v825 = vpop.f32.mrb[0].mxu0
  %826 = vmatprep.mubr.f32.mxu0 0.0
  %827 = vmatmul.mubr.f32.gmra.mrb[0].mxu0 %v701
  %v828 = vpop.f32.mrb[0].mxu0
  %v829 = vadd.f32 0.0, %v828
  %v830 = vpop.f32.mrb[0].mxu0
  %831 = vdwg.mxu0
  %832 = vrot.lane.b32.xlu0 %v671, 64
  %v833 = vpop.permute.xlu0 %832
  %834 = vrot.lane.b32.xlu0 %v672, 64
  %v835 = vpop.permute.xlu0 %834
  %836 = vrot.lane.b32.xlu0 %v673, 64
  %v837 = vpop.permute.xlu0 %836
  %838 = vrot.lane.b32.xlu0 %v674, 64
  %v839 = vpop.permute.xlu0 %838
  %840 = vrot.lane.b32.xlu0 %v675, 64
  %v841 = vpop.permute.xlu0 %840
  %842 = vrot.lane.b32.xlu0 %v676, 64
  %v843 = vpop.permute.xlu0 %842
  %844 = vrot.lane.b32.xlu0 %v677, 64
  %v845 = vpop.permute.xlu0 %844
  %846 = vrot.lane.b32.xlu0 %v678, 64
  %v847 = vpop.permute.xlu0 %846
  %864 = vrot.lane.b32.xlu0 %v410, 69
  %v865 = vpop.permute.xlu0 %864
  %866 = vrot.lane.b32.xlu0 %v411, 69
  %v867 = vpop.permute.xlu0 %866
  %868 = vrot.lane.b32.xlu0 %v412, 69
  %v869 = vpop.permute.xlu0 %868
  %870 = vrot.lane.b32.xlu0 %v413, 69
  %v871 = vpop.permute.xlu0 %870
  %872 = vrot.lane.b32.xlu0 %v414, 69
  %v873 = vpop.permute.xlu0 %872
  %874 = vrot.lane.b32.xlu0 %v415, 69
  %v875 = vpop.permute.xlu0 %874
  %876 = vrot.lane.b32.xlu0 %v416, 69
  %v877 = vpop.permute.xlu0 %876
  %878 = vrot.lane.b32.xlu0 %v417, 69
  %v879 = vpop.permute.xlu0 %878
  %896 = vrot.lane.b32.xlu0 %v634, 74
  %v897 = vpop.permute.xlu0 %896
  %898 = vrot.lane.b32.xlu0 %v635, 74
  %v899 = vpop.permute.xlu0 %898
  %900 = vrot.lane.b32.xlu0 %v636, 74
  %v901 = vpop.permute.xlu0 %900
  %902 = vrot.lane.b32.xlu0 %v637, 74
  %v903 = vpop.permute.xlu0 %902
  %904 = vrot.lane.b32.xlu0 %v638, 74
  %v905 = vpop.permute.xlu0 %904
  %906 = vrot.lane.b32.xlu0 %v639, 74
  %v907 = vpop.permute.xlu0 %906
  %908 = vrot.lane.b32.xlu0 %v640, 74
  %v909 = vpop.permute.xlu0 %908
  %910 = vrot.lane.b32.xlu0 %v641, 74
  %v911 = vpop.permute.xlu0 %910
  %920 = vrot.lane.b32.xlu0 %v302, 79
  %v921 = vpop.permute.xlu0 %920
  %922 = vrot.lane.b32.xlu0 %v303, 79
  %v923 = vpop.permute.xlu0 %922
  %924 = vrot.lane.b32.xlu0 %v304, 79
  %v925 = vpop.permute.xlu0 %924
  %926 = vrot.lane.b32.xlu0 %v305, 79
  %v927 = vpop.permute.xlu0 %926
  %928 = vrot.lane.b32.xlu0 %v306, 79
  %v929 = vpop.permute.xlu0 %928
  %930 = vrot.lane.b32.xlu0 %v307, 79
  %v931 = vpop.permute.xlu0 %930
  %932 = vrot.lane.b32.xlu0 %v308, 79
  %v933 = vpop.permute.xlu0 %932
  %934 = vrot.lane.b32.xlu0 %v309, 79
  %v935 = vpop.permute.xlu0 %934
  %vm944 = vcmask 523264
  %v945 = vsel %vm944, %v794, %v833
  %v946 = vsel %vm944, %v799, %v835
  %v947 = vsel %vm944, %v804, %v837
  %v948 = vsel %vm944, %v809, %v839
  %v949 = vsel %vm944, %v814, %v841
  %v950 = vsel %vm944, %v819, %v843
  %v951 = vsel %vm944, %v824, %v845
  %v952 = vsel %vm944, %v829, %v847
  %vm953 = vcmask 564224
  %v954 = vsel %vm953, %v945, %v865
  %v955 = vsel %vm953, %v946, %v867
  %v956 = vsel %vm953, %v947, %v869
  %v957 = vsel %vm953, %v948, %v871
  %v958 = vsel %vm953, %v949, %v873
  %v959 = vsel %vm953, %v950, %v875
  %v960 = vsel %vm953, %v951, %v877
  %v961 = vsel %vm953, %v952, %v879
  %vm962 = vcmask 605184
  %v963 = vsel %vm962, %v954, %v897
  %v964 = vsel %vm962, %v955, %v899
  %v965 = vsel %vm962, %v956, %v901
  %v966 = vsel %vm962, %v957, %v903
  %v967 = vsel %vm962, %v958, %v905
  %v968 = vsel %vm962, %v959, %v907
  %v969 = vsel %vm962, %v960, %v909
  %v970 = vsel %vm962, %v961, %v911
  %vm971 = vcmask 646144
  %v972 = vsel %vm971, %v963, %v921
  %v973 = vsel %vm971, %v964, %v923
  %v974 = vsel %vm971, %v965, %v925
  %v975 = vsel %vm971, %v966, %v927
  %v976 = vsel %vm971, %v967, %v929
  %v977 = vsel %vm971, %v968, %v931
  %v978 = vsel %vm971, %v969, %v933
  %v979 = vsel %vm971, %v970, %v935
  %vm980 = vcmask 687104
  %v981 = vsel %vm980, %v972, 0.0
  %v982 = vsel %vm980, %v973, 0.0
  %v983 = vsel %vm980, %v974, 0.0
  %v984 = vsel %vm980, %v975, 0.0
  %v985 = vsel %vm980, %v976, 0.0
  %v986 = vsel %vm980, %v977, 0.0
  %v987 = vsel %vm980, %v978, 0.0
  %v988 = vsel %vm980, %v979, 0.0
  %989 = vst [vmem:[%s6] sm:$0xff] %v981
  %990 = vst [vmem:[%s6 + $0x8] sm:$0xff] %v982
  %991 = vst [vmem:[%s6 + $0x10] sm:$0xff] %v983
  %992 = vst [vmem:[%s6 + $0x18] sm:$0xff] %v984
  %993 = vst [vmem:[%s6 + $0x20] sm:$0xff] %v985
  %994 = vst [vmem:[%s6 + $0x28] sm:$0xff] %v986
  %995 = vst [vmem:[%s6 + $0x30] sm:$0xff] %v987
  %996 = vst [vmem:[%s6 + $0x38] sm:$0xff] %v988
  // Predicated region
  $region26: #{signal_reconstructor_forward.1} parent=0 // pred_check
    _
  $region27: #{signal_reconstructor_forward.1} parent=0 // pred_check_branch
    %998 = sbr.rel (0) target = $region29
  $region28: #{signal_reconstructor_forward.1} parent=0 // pred_region
    _
  $region29: #{signal_reconstructor_forward.1} parent=0 // pred_fallthru
    _
  // Predicated region
  $region30: #{signal_reconstructor_forward.1} parent=0 // pred_check
    _
  $region31: #{signal_reconstructor_forward.1} parent=0 // pred_check_branch
    %1000 = sbr.rel (0) target = $region33
  $region32: #{signal_reconstructor_forward.1} parent=0 // pred_region
    _
  $region33: #{signal_reconstructor_forward.1} parent=0 // pred_fallthru
    _

</llo_original>
